<compile_context>
chip_gen: v7x
topology: tpu7x:2x2x1
jax: 0.10.0
libtpu: 0.0.40
codegen_flags: <defaults>
</compile_context>

<pallas_src>
import jax
import jax.numpy as jnp
from jax.experimental import pallas as pl
from jax.experimental.pallas import tpu as pltpu


def _identity_kernel(x_ref, o_ref):
    # Pure copy: the entire "compute" of an identity forward.
    o_ref[...] = x_ref[...]


# Widest lane-dense column counts to try (all multiples of 128).
_COL_CANDIDATES = (8192, 4096, 2048, 1024, 512, 256, 128)
# ~2 MiB per block: near the HBM roofline on v5e/v6e/v7x with modest VMEM use.
_TARGET_BLOCK_BYTES = 2 * 1024 * 1024
# Budget for the single-block ragged fallback (input + output blocks both live).
_RAGGED_SINGLE_BLOCK_BYTES = 8 * 1024 * 1024


def _copy_call(x2d, block_rows, grid, n, itemsize):
    rows, cols = x2d.shape
    return pl.pallas_call(
        _identity_kernel,
        out_shape=jax.ShapeDtypeStruct((rows, cols), x2d.dtype),
        grid_spec=pltpu.PrefetchScalarGridSpec(
            num_scalar_prefetch=0,
            grid=grid,
            in_specs=[pl.BlockSpec((block_rows, cols), lambda i: (i, 0))],
            out_specs=pl.BlockSpec((block_rows, cols), lambda i: (i, 0)),
        ),
        compiler_params=pltpu.CompilerParams(
            dimension_semantics=("parallel",),
            vmem_limit_bytes=32 * 1024 * 1024,
        ),
        cost_estimate=pl.CostEstimate(
            flops=0,
            transcendentals=0,
            bytes_accessed=2 * n * itemsize,
        ),
    )(x2d)


def identity_forward(x):
    """Identity forward pass via a Pallas copy kernel (no extra HBM passes)."""
    orig_shape = x.shape
    n = x.size
    if n == 0:
        return x

    itemsize = jnp.dtype(x.dtype).itemsize
    # dtype-aware sublane multiple: 8 (32-bit), 16 (16-bit), 32 (8-bit).
    sublane = max(8, 32 // max(itemsize, 1))

    cols = next((c for c in _COL_CANDIDATES if n % c == 0), None)

    if cols is None:
        # Ragged total size (not a multiple of 128).  Run a single full-array
        # block (block dims == array dims is always legal; partial lanes use
        # masked stores) when it fits comfortably in VMEM; otherwise the
        # identity needs no compute at all, so return the input directly.
        # TODO(synk): for large ragged inputs, a masked pltpu.store on the
        # final grid step would allow a tiled kernel pass as well.
        if n * itemsize <= _RAGGED_SINGLE_BLOCK_BYTES:
            x2d = x.reshape(1, n)
            out2d = _copy_call(x2d, block_rows=1, grid=(1,), n=n, itemsize=itemsize)
            return out2d.reshape(orig_shape)
        return x

    rows = n // cols
    x2d = x.reshape(rows, cols)  # metadata-only reshape of a contiguous array

    row_bytes = cols * itemsize
    if rows <= sublane or rows * row_bytes <= _TARGET_BLOCK_BYTES:
        # Single block covering all rows (block dim == full array dim is legal
        # even when rows is not a multiple of the sublane count).
        block_rows = rows
    else:
        block_rows = max(
            sublane, (_TARGET_BLOCK_BYTES // row_bytes) // sublane * sublane
        )
    # Non-divisible row counts are fine: Pallas masks the partial tail block.
    grid = (pl.cdiv(rows, block_rows),)

    out2d = _copy_call(x2d, block_rows, grid, n, itemsize)
    return out2d.reshape(orig_shape)


if __name__ == "__main__":
    key = jax.random.PRNGKey(0)
    # NCHW input, small shape consistent with a conv-style feature map.
    x = jax.random.normal(key, (2, 4, 16, 16), dtype=jnp.float32)

    y = identity_forward(x)
    jax.block_until_ready(y)

    assert y.shape == x.shape and y.dtype == x.dtype
    assert jnp.array_equal(y, x)
    print("KERNEL_OK")
</pallas_src>

<mosaic_0001>
module attributes {stable_mosaic.version = 11 : i64} {
  func.func @_identity_kernel(%arg0: i32, %arg1: memref<1x2048xf32, #tpu.memory_space<vmem>>, %arg2: memref<1x2048xf32, #tpu.memory_space<vmem>>) attributes {dimension_semantics = [#tpu.dimension_semantics<parallel>], iteration_bounds = array<i64: 1>, scalar_prefetch = 0 : i64, scratch_operands = 0 : i64, tpu.core_type = #tpu.core_type<tc>, window_params = [{transform_indices = @transform_0, window_bounds = array<i64: 1, 2048>}, {transform_indices = @transform_1, window_bounds = array<i64: 1, 2048>}]} {
    %c0 = arith.constant 0 : index
    %c0_0 = arith.constant 0 : index
    %0 = vector.load %arg1[%c0, %c0_0] : memref<1x2048xf32, #tpu.memory_space<vmem>>, vector<1x2048xf32>
    %c0_1 = arith.constant 0 : index
    %c0_2 = arith.constant 0 : index
    %1 = vector.load %arg2[%c0_1, %c0_2] : memref<1x2048xf32, #tpu.memory_space<vmem>>, vector<1x2048xf32>
    tpu.vector_store %arg2[%c0_1, %c0_2], %0 {strides = array<i32>} : memref<1x2048xf32, #tpu.memory_space<vmem>>, vector<1x2048xf32>,
    return
  }
  func.func @transform_0(%arg0: i32) -> (i32, i32) {
    %c0_i32 = arith.constant 0 : i32
    %c0_i32_0 = arith.constant 0 : i32
    return %arg0, %c0_i32 : i32, i32
  }
  func.func @transform_1(%arg0: i32) -> (i32, i32) {
    %c0_i32 = arith.constant 0 : i32
    %c0_i32_0 = arith.constant 0 : i32
    return %arg0, %c0_i32 : i32, i32
  }
}

</mosaic_0001>

<llo_original>
// kernel: tpu_custom_call.1
$region0: #{tpu_custom_call.1}
  #allocation0 [shape = 'u32[]', space=smem, size = 0x4, offset = 0x4, fixed_abs, tag = 'smem constant byte address 0x4 - core index']
  #allocation1 [shape = 'u32[144,128]{1,0:T(1,128)}', space=vmem, size = 0x12000, scoped, tag = 'internal scratch']
  %s0 = inlined_call_operand.hbm [shape: f32[1,2048], index: 0, kind: input, shape index: {}]
  %s1 = inlined_call_operand.hbm [shape: f32[1,2048], index: 1, kind: output, shape index: {}]
  %s2 = sld [smem:[#allocation0]]
  $region18: #{tpu_custom_call.1} parent=0
    _
  %s4 = ssub.s32 1, %s2
  %s5 = scalar_select 0, %s4, %s2
  $region1: #{tpu_custom_call.1} parent=0
    #allocation2 [shape = 'u8[8192]{0}', space=vmem, size = 0x2000, scoped, tag = 'input window, operand 0, single buffered']
    #allocation3 [shape = 's32[1]{0}', space=sflag, size = 0x4, scoped, tag = 'scoped memory for tpu_custom_call.1']
    #allocation4 [shape = 's32[1]{0}', space=sflag, size = 0x4, scoped, tag = 'scoped memory for tpu_custom_call.1']
    #allocation5 [shape = 'u8[8192]{0}', space=vmem, size = 0x2000, scoped, tag = 'output window, operand 0, single buffered']
    %6 = vsyncpa [#allocation3], 0
    %7 = vsyncpa [#allocation4], 0
    // Predicated region
    $region2: #{tpu_custom_call.1} parent=1 // pred_check
      _
    $region3: #{tpu_custom_call.1} parent=1 // pred_check_branch
      %9 = sbr.rel (0) target = $region5
    $region4: #{tpu_custom_call.1} parent=1 // pred_region
      %s11 = ssub.s32 256, 256
      %12 = vsyncadd [#allocation3], %s11
      %s14 = sshll.u32 [#allocation2], 4
      %s15 = int_to_ptr.vmem [resolvable:$true] %s14
      %17 = dma.hbm_to_vmem [thread:$0]  %s0, 256, %s15, [#allocation3]
    $region5: #{tpu_custom_call.1} parent=1 // pred_fallthru
      _
    // Predicated region
    $region6: #{tpu_custom_call.1} parent=1 // pred_check
      _
    $region7: #{tpu_custom_call.1} parent=1 // pred_check_branch
      %19 = sbr.rel (0) target = $region9
    $region8: #{tpu_custom_call.1} parent=1 // pred_region
      %20 = dma.done [#allocation3], 256
    $region9: #{tpu_custom_call.1} parent=1 // pred_fallthru
      _
    %v21 = vld [vmem:[#allocation2] sm:$0xff]
    %v22 = vld [vmem:[#allocation2 + $0x8] sm:$0xff]
    %23 = vst [vmem:[#allocation5] sm:$0xff] %v21
    %24 = vst [vmem:[#allocation5 + $0x8] sm:$0xff] %v22
    // Predicated region
    $region10: #{tpu_custom_call.1} parent=1 // pred_check
      _
    $region11: #{tpu_custom_call.1} parent=1 // pred_check_branch
      %26 = sbr.rel (0) target = $region13
    $region12: #{tpu_custom_call.1} parent=1 // pred_region
      %s28 = ssub.s32 256, 256
      %29 = vsyncadd [#allocation4], %s28
      %s31 = sshll.u32 [#allocation5], 4
      %s32 = int_to_ptr.vmem [resolvable:$true] %s31
      %34 = dma.vmem_to_hbm [thread:$0]  %s32, 256, %s1, [#allocation4]
    $region13: #{tpu_custom_call.1} parent=1 // pred_fallthru
      _
    // Predicated region
    $region14: #{tpu_custom_call.1} parent=1 // pred_check
      _
    $region15: #{tpu_custom_call.1} parent=1 // pred_check_branch
      %36 = sbr.rel (0) target = $region17
    $region16: #{tpu_custom_call.1} parent=1 // pred_region
      %37 = dma.done [#allocation4], 256
    $region17: #{tpu_custom_call.1} parent=1 // pred_fallthru
      _
    %38 = vsyncpa [#allocation3], 1
    %39 = vsyncpa [#allocation4], 1

</llo_original>
